<compile_context>
chip_gen: v7x
topology: tpu7x:2x2x1
jax: 0.10.0
libtpu: 0.0.40
codegen_flags: <defaults>
</compile_context>

<pallas_src>
import functools
import math

import jax
import jax.numpy as jnp
from jax import lax
from jax.experimental import pallas as pl
from jax.experimental.pallas import tpu as pltpu

ALPHA = 0.15
GAMMA = 2.0            # statically 2 -> (1 - pt)**2 computed as a product
IGNORE_INDEX = 255

LANES = 128
DEFAULT_BLOCK_ROWS = 2048   # 2048*128: 1 MiB f32 preds tile + 0.25 MiB u8 labels tile


def _make_kernel(steps_per_core, block_rows, rows, full_blocks):
    """Kernel producing per-core (8,128) partial sums of masked BCE and valid counts."""

    def kernel(preds_ref, labels_ref, sum_ref, cnt_ref):
        c = pl.program_id(0)   # core (parallel) axis
        j = pl.program_id(1)   # streaming (arbitrary / reduction) axis

        @pl.when(j == 0)
        def _():
            sum_ref[...] = jnp.zeros_like(sum_ref)
            cnt_ref[...] = jnp.zeros_like(cnt_ref)

        p = preds_ref[...].astype(jnp.float32)
        y = labels_ref[...]
        if jnp.issubdtype(y.dtype, jnp.integer) and y.dtype.itemsize < 4:
            # Cheap in-kernel unpack; HBM label traffic stays at 1 B/elem.
            y = y.astype(jnp.int32)

        valid = y != IGNORE_INDEX
        # Single-transcendental BCE (hard labels): only the selected log term is nonzero.
        # The -100 clamp matches torch.nn.BCELoss.
        q = jnp.where(y == 1, p, 1.0 - p)
        bce = -jnp.maximum(jnp.log(q), -100.0)

        def accumulate(mask):
            bce_m = jnp.where(mask, bce, 0.0)
            one_m = jnp.where(mask, 1.0, 0.0)
            if block_rows % 8 == 0:
                # Vreg-wise collapse to a full (8,128) slab: leading-axis reduce = VALU adds,
                # no XLU / masked partial stores in the inner loop.
                sum_ref[...] += jnp.sum(bce_m.reshape(block_rows // 8, 8, LANES), axis=0)
                cnt_ref[...] += jnp.sum(one_m.reshape(block_rows // 8, 8, LANES), axis=0)
            else:
                # Tiny single-block fallback (rows not a multiple of 8).
                sum_ref[0:1, :] += jnp.sum(bce_m, axis=0, keepdims=True)
                cnt_ref[0:1, :] += jnp.sum(one_m, axis=0, keepdims=True)

        b = c * steps_per_core + j   # logical block index (may exceed the real block count)

        @pl.when(b < full_blocks)    # steady state: block fully inside the array, no row mask
        def _():
            accumulate(valid)

        @pl.when(b >= full_blocks)   # partial tail block, or clamped duplicate block
        def _():
            rows_left = rows - b * block_rows          # <= 0 for duplicate blocks
            row_ids = lax.broadcasted_iota(jnp.int32, (block_rows, LANES), 0)
            accumulate(valid & (row_ids < rows_left))

    return kernel


@functools.partial(jax.jit, static_argnames=("block_rows",))
def focal_loss_01(preds, labels, block_rows=DEFAULT_BLOCK_ROWS):
    """Pallas focal loss. preds in (0,1) (f32 or bf16); labels in {0,1,255} (uint8/int/float)."""
    assert preds.shape == labels.shape
    n = math.prod(preds.shape)

    p_flat = preds.reshape(-1)
    y_flat = labels.reshape(-1)

    # Pad only the lane remainder (guarded: no-op / no copy in the common aligned case).
    # Padded labels carry the ignore value so they never contribute; padded preds stay finite.
    rem = (-n) % LANES
    if rem:
        p_flat = jnp.pad(p_flat, (0, rem), constant_values=0.5)
        y_flat = jnp.pad(y_flat, (0, rem), constant_values=IGNORE_INDEX)
    rows = (n + rem) // LANES

    if rows <= block_rows:
        block_rows = rows                                # single full-extent block
    else:
        # Multiple of 32 satisfies sublane tiling for u8 (32), bf16 (16) and f32 (8) inputs.
        block_rows = max(32, (block_rows // 32) * 32)

    row_blocks = -(-rows // block_rows)
    full_blocks = rows // block_rows                     # blocks entirely inside `rows`
    ncores = 2 if row_blocks >= 2 else 1
    steps_per_core = -(-row_blocks // ncores)

    p2d = p_flat.reshape(rows, LANES)
    y2d = y_flat.reshape(rows, LANES)

    def in_index_map(c, j):
        # Clamp fully out-of-range blocks (odd block count split over 2 cores) onto the last
        # real block; their contribution is masked in-kernel (tail branch, rows_left <= 0).
        return (jnp.minimum(c * steps_per_core + j, row_blocks - 1), 0)

    # Only CORE_PARALLEL actually shards a grid axis across v7x's two TensorCores; keep the
    # portable string semantics on single-TC generations (v5e/v6e).
    dim_sem = ("parallel", "arbitrary")
    if ncores == 2:
        try:
            kind = jax.devices()[0].device_kind.lower()
        except Exception:
            kind = ""
        if "v7" in kind:
            dim_sem = (pltpu.CORE_PARALLEL, pltpu.ARBITRARY)

    sum_part, cnt_part = pl.pallas_call(
        _make_kernel(steps_per_core, block_rows, rows, full_blocks),
        out_shape=(
            jax.ShapeDtypeStruct((8 * ncores, LANES), jnp.float32),
            jax.ShapeDtypeStruct((8 * ncores, LANES), jnp.float32),
        ),
        grid_spec=pltpu.PrefetchScalarGridSpec(
            num_scalar_prefetch=0,
            grid=(ncores, steps_per_core),
            in_specs=[
                pl.BlockSpec((block_rows, LANES), in_index_map),
                pl.BlockSpec((block_rows, LANES), in_index_map),
            ],
            out_specs=(
                pl.BlockSpec((8, LANES), lambda c, j: (c, 0)),
                pl.BlockSpec((8, LANES), lambda c, j: (c, 0)),
            ),
        ),
        compiler_params=pltpu.CompilerParams(dimension_semantics=dim_sem),
    )(p2d, y2d)

    # Single cross-lane reduce + focal transform (tiny: 2 * 8 * ncores * 128 floats).
    total_sum = jnp.sum(sum_part)
    total_cnt = jnp.sum(cnt_part)
    # NOTE: if every element carries ignore_index, total_cnt == 0 -> NaN, matching PyTorch's
    # mean-over-zero-elements behaviour.
    bce_mean = total_sum / total_cnt
    logpt = -bce_mean
    pt = jnp.exp(logpt)
    one_minus_pt = 1.0 - pt
    return -(one_minus_pt * one_minus_pt) * ALPHA * logpt    # gamma == 2


def _reference_focal_loss(preds, labels):
    """Pure-JAX reference using the general two-log BCE formula (matches the PyTorch module)."""
    p = preds.reshape(-1).astype(jnp.float32)
    y = labels.reshape(-1).astype(jnp.float32)
    valid = y != IGNORE_INDEX
    log_p = jnp.maximum(jnp.log(p), -100.0)
    log_1mp = jnp.maximum(jnp.log(1.0 - p), -100.0)
    bce = -(y * log_p + (1.0 - y) * log_1mp)
    bce_mean = jnp.sum(jnp.where(valid, bce, 0.0)) / jnp.sum(valid.astype(jnp.float32))
    logpt = -bce_mean
    pt = jnp.exp(logpt)
    return -((1.0 - pt) ** GAMMA) * ALPHA * logpt


if __name__ == "__main__":
    key = jax.random.PRNGKey(0)

    def make_inputs(shape, k, pred_dtype=jnp.float32, label_dtype=jnp.uint8):
        k_p, k_y, k_m = jax.random.split(k, 3)
        preds = jax.random.uniform(k_p, shape, dtype=jnp.float32,
                                   minval=1e-4, maxval=1.0 - 1e-4).astype(pred_dtype)
        labels = jax.random.bernoulli(k_y, p=0.3, shape=shape).astype(jnp.int32)
        ignore = jax.random.bernoulli(k_m, p=0.1, shape=shape)
        labels = jnp.where(ignore, IGNORE_INDEX, labels).astype(label_dtype)
        return preds, labels

    k0, k1, k2, k3 = jax.random.split(key, 4)

    # 1) Primary NCHW segmentation-style case: f32 preds + uint8 labels, single-block fast path.
    preds, labels = make_inputs((2, 4, 16, 16), k0)
    loss = jax.block_until_ready(focal_loss_01(preds, labels))
    ref = jax.block_until_ready(_reference_focal_loss(preds, labels))
    assert jnp.allclose(loss, ref, rtol=1e-5, atol=1e-6), (loss, ref)

    # 2) Lane-remainder padding + single block with rows not a multiple of 8 (fallback accum).
    preds, labels = make_inputs((1, 3, 23, 31), k1)            # n = 2139 -> rows = 17
    loss = jax.block_until_ready(focal_loss_01(preds, labels, block_rows=32))
    ref = jax.block_until_ready(_reference_focal_loss(preds, labels))
    assert jnp.allclose(loss, ref, rtol=1e-5, atol=1e-6), (loss, ref)

    # 3) Multi-block two-core path: partial tail block + clamped duplicate block.
    preds, labels = make_inputs((2, 4, 33, 37), k2)            # n = 9768 -> rows = 77
    loss = jax.block_until_ready(focal_loss_01(preds, labels, block_rows=32))
    ref = jax.block_until_ready(_reference_focal_loss(preds, labels))
    assert jnp.allclose(loss, ref, rtol=1e-5, atol=1e-6), (loss, ref)

    # 4) bf16 preds + float32 labels (non-narrow label path, in-kernel upcast).
    preds, labels = make_inputs((2, 4, 16, 16), k3,
                                pred_dtype=jnp.bfloat16, label_dtype=jnp.float32)
    loss = jax.block_until_ready(focal_loss_01(preds, labels))
    ref = jax.block_until_ready(_reference_focal_loss(preds, labels))
    assert jnp.allclose(loss, ref, rtol=1e-5, atol=1e-6), (loss, ref)

    print("KERNEL_OK")
</pallas_src>

<mosaic_0001>
module attributes {stable_mosaic.version = 11 : i64} {
  func.func @kernel(%arg0: i32, %arg1: i32, %arg2: memref<16x128xf32, #tpu.memory_space<vmem>>, %arg3: memref<16x128xi8, #tpu.memory_space<vmem>>, %arg4: memref<8x128xf32, #tpu.memory_space<vmem>>, %arg5: memref<8x128xf32, #tpu.memory_space<vmem>>) attributes {dimension_semantics = [#tpu.dimension_semantics<parallel>, #tpu.dimension_semantics<arbitrary>], iteration_bounds = array<i64: 1, 1>, scalar_prefetch = 0 : i64, scratch_operands = 0 : i64, tpu.core_type = #tpu.core_type<tc>, window_params = [{transform_indices = @transform_0, window_bounds = array<i64: 16, 128>}, {transform_indices = @transform_1, window_bounds = array<i64: 16, 128>}, {transform_indices = @transform_2, window_bounds = array<i64: 8, 128>}, {transform_indices = @transform_3, window_bounds = array<i64: 8, 128>}]} {
    %c0_i32 = arith.constant 0 : i32
    %0 = arith.cmpi eq, %arg1, %c0_i32 : i32
    %1 = arith.extui %0 : i1 to i32
    %c0_i32_0 = arith.constant 0 : i32
    %2 = arith.cmpi ne, %1, %c0_i32_0 : i32
    scf.if %2 {
      %cst_11 = arith.constant 0.000000e+00 : f32
      %26 = vector.broadcast %cst_11 : f32 to vector<8x128xf32>
      %c0_12 = arith.constant 0 : index
      %c0_13 = arith.constant 0 : index
      %27 = vector.load %arg4[%c0_12, %c0_13] : memref<8x128xf32, #tpu.memory_space<vmem>>, vector<8x128xf32>
      tpu.vector_store %arg4[%c0_12, %c0_13], %26 {strides = array<i32>} : memref<8x128xf32, #tpu.memory_space<vmem>>, vector<8x128xf32>,
      %cst_14 = arith.constant 0.000000e+00 : f32
      %28 = vector.broadcast %cst_14 : f32 to vector<8x128xf32>
      %c0_15 = arith.constant 0 : index
      %c0_16 = arith.constant 0 : index
      %29 = vector.load %arg5[%c0_15, %c0_16] : memref<8x128xf32, #tpu.memory_space<vmem>>, vector<8x128xf32>
      tpu.vector_store %arg5[%c0_15, %c0_16], %28 {strides = array<i32>} : memref<8x128xf32, #tpu.memory_space<vmem>>, vector<8x128xf32>,
    } else {
    }
    %c0 = arith.constant 0 : index
    %c0_1 = arith.constant 0 : index
    %3 = vector.load %arg2[%c0, %c0_1] : memref<16x128xf32, #tpu.memory_space<vmem>>, vector<16x128xf32>
    %c0_2 = arith.constant 0 : index
    %c0_3 = arith.constant 0 : index
    %4 = vector.load %arg3[%c0_2, %c0_3] : memref<16x128xi8, #tpu.memory_space<vmem>>, vector<16x128xi8>
    %5 = arith.extui %4 : vector<16x128xi8> to vector<16x128xi32>
    %c255_i32 = arith.constant 255 : i32
    %6 = vector.broadcast %c255_i32 : i32 to vector<16x128xi32>
    %7 = arith.cmpi ne, %5, %6 : vector<16x128xi32>
    %c1_i32 = arith.constant 1 : i32
    %8 = vector.broadcast %c1_i32 : i32 to vector<16x128xi32>
    %9 = arith.cmpi eq, %5, %8 : vector<16x128xi32>
    %cst = arith.constant 1.000000e+00 : f32
    %10 = vector.broadcast %cst : f32 to vector<16x128xf32>
    %11 = arith.subf %10, %3 : vector<16x128xf32>
    %12 = arith.select %9, %3, %11 : vector<16x128xi1>, vector<16x128xf32>
    %13 = math.log %12 : vector<16x128xf32>
    %cst_4 = arith.constant -1.000000e+02 : f32
    %14 = vector.broadcast %cst_4 : f32 to vector<16x128xf32>
    %15 = arith.maximumf %13, %14 : vector<16x128xf32>
    %cst_5 = arith.constant 0.000000e+00 : f32
    %16 = vector.broadcast %cst_5 : f32 to vector<16x128xf32>
    %17 = arith.subf %16, %15 : vector<16x128xf32>
    %c1_i32_6 = arith.constant 1 : i32
    %18 = arith.muli %arg0, %c1_i32_6 : i32
    %19 = arith.addi %18, %arg1 : i32
    %c1_i32_7 = arith.constant 1 : i32
    %20 = arith.cmpi slt, %19, %c1_i32_7 : i32
    %21 = arith.extui %20 : i1 to i32
    %c0_i32_8 = arith.constant 0 : i32
    %22 = arith.cmpi ne, %21, %c0_i32_8 : i32
    scf.if %22 {
      %cst_11 = arith.constant 0.000000e+00 : f32
      %26 = vector.broadcast %cst_11 : f32 to vector<16x128xf32>
      %27 = arith.select %7, %17, %26 : vector<16x128xi1>, vector<16x128xf32>
      %cst_12 = arith.constant 1.000000e+00 : f32
      %cst_13 = arith.constant 0.000000e+00 : f32
      %28 = vector.broadcast %cst_12 : f32 to vector<16x128xf32>
      %29 = vector.broadcast %cst_13 : f32 to vector<16x128xf32>
      %30 = arith.select %7, %28, %29 : vector<16x128xi1>, vector<16x128xf32>
      %c0_14 = arith.constant 0 : index
      %c0_15 = arith.constant 0 : index
      %31 = vector.load %arg4[%c0_14, %c0_15] : memref<8x128xf32, #tpu.memory_space<vmem>>, vector<8x128xf32>
      %32 = vector.shape_cast %27 : vector<16x128xf32> to vector<2x8x128xf32>
      %cst_16 = arith.constant dense<0.000000e+00> : vector<8x128xf32>
      %33 = vector.multi_reduction <add>, %32, %cst_16 [0] : vector<2x8x128xf32> to vector<8x128xf32>
      %34 = arith.addf %31, %33 : vector<8x128xf32>
      %c0_17 = arith.constant 0 : index
      %c0_18 = arith.constant 0 : index
      %35 = vector.load %arg4[%c0_17, %c0_18] : memref<8x128xf32, #tpu.memory_space<vmem>>, vector<8x128xf32>
      tpu.vector_store %arg4[%c0_17, %c0_18], %34 {strides = array<i32>} : memref<8x128xf32, #tpu.memory_space<vmem>>, vector<8x128xf32>,
      %c0_19 = arith.constant 0 : index
      %c0_20 = arith.constant 0 : index
      %36 = vector.load %arg5[%c0_19, %c0_20] : memref<8x128xf32, #tpu.memory_space<vmem>>, vector<8x128xf32>
      %37 = vector.shape_cast %30 : vector<16x128xf32> to vector<2x8x128xf32>
      %cst_21 = arith.constant dense<0.000000e+00> : vector<8x128xf32>
      %38 = vector.multi_reduction <add>, %37, %cst_21 [0] : vector<2x8x128xf32> to vector<8x128xf32>
      %39 = arith.addf %36, %38 : vector<8x128xf32>
      %c0_22 = arith.constant 0 : index
      %c0_23 = arith.constant 0 : index
      %40 = vector.load %arg5[%c0_22, %c0_23] : memref<8x128xf32, #tpu.memory_space<vmem>>, vector<8x128xf32>
      tpu.vector_store %arg5[%c0_22, %c0_23], %39 {strides = array<i32>} : memref<8x128xf32, #tpu.memory_space<vmem>>, vector<8x128xf32>,
    } else {
    }
    %c1_i32_9 = arith.constant 1 : i32
    %23 = arith.cmpi sge, %19, %c1_i32_9 : i32
    %24 = arith.extui %23 : i1 to i32
    %c0_i32_10 = arith.constant 0 : i32
    %25 = arith.cmpi ne, %24, %c0_i32_10 : i32
    scf.if %25 {
      %c16_i32 = arith.constant 16 : i32
      %26 = arith.muli %19, %c16_i32 : i32
      %c16_i32_11 = arith.constant 16 : i32
      %27 = arith.subi %c16_i32_11, %26 : i32
      %28 = tpu.iota {dimensions = array<i32: 0>} : vector<16x128xi32>
      %29 = vector.broadcast %27 : i32 to vector<16x128xi32>
      %30 = arith.cmpi slt, %28, %29 : vector<16x128xi32>
      %31 = arith.andi %7, %30 : vector<16x128xi1>
      %cst_12 = arith.constant 0.000000e+00 : f32
      %32 = vector.broadcast %cst_12 : f32 to vector<16x128xf32>
      %33 = arith.select %31, %17, %32 : vector<16x128xi1>, vector<16x128xf32>
      %cst_13 = arith.constant 1.000000e+00 : f32
      %cst_14 = arith.constant 0.000000e+00 : f32
      %34 = vector.broadcast %cst_13 : f32 to vector<16x128xf32>
      %35 = vector.broadcast %cst_14 : f32 to vector<16x128xf32>
      %36 = arith.select %31, %34, %35 : vector<16x128xi1>, vector<16x128xf32>
      %c0_15 = arith.constant 0 : index
      %c0_16 = arith.constant 0 : index
      %37 = vector.load %arg4[%c0_15, %c0_16] : memref<8x128xf32, #tpu.memory_space<vmem>>, vector<8x128xf32>
      %38 = vector.shape_cast %33 : vector<16x128xf32> to vector<2x8x128xf32>
      %cst_17 = arith.constant dense<0.000000e+00> : vector<8x128xf32>
      %39 = vector.multi_reduction <add>, %38, %cst_17 [0] : vector<2x8x128xf32> to vector<8x128xf32>
      %40 = arith.addf %37, %39 : vector<8x128xf32>
      %c0_18 = arith.constant 0 : index
      %c0_19 = arith.constant 0 : index
      %41 = vector.load %arg4[%c0_18, %c0_19] : memref<8x128xf32, #tpu.memory_space<vmem>>, vector<8x128xf32>
      tpu.vector_store %arg4[%c0_18, %c0_19], %40 {strides = array<i32>} : memref<8x128xf32, #tpu.memory_space<vmem>>, vector<8x128xf32>,
      %c0_20 = arith.constant 0 : index
      %c0_21 = arith.constant 0 : index
      %42 = vector.load %arg5[%c0_20, %c0_21] : memref<8x128xf32, #tpu.memory_space<vmem>>, vector<8x128xf32>
      %43 = vector.shape_cast %36 : vector<16x128xf32> to vector<2x8x128xf32>
      %cst_22 = arith.constant dense<0.000000e+00> : vector<8x128xf32>
      %44 = vector.multi_reduction <add>, %43, %cst_22 [0] : vector<2x8x128xf32> to vector<8x128xf32>
      %45 = arith.addf %42, %44 : vector<8x128xf32>
      %c0_23 = arith.constant 0 : index
      %c0_24 = arith.constant 0 : index
      %46 = vector.load %arg5[%c0_23, %c0_24] : memref<8x128xf32, #tpu.memory_space<vmem>>, vector<8x128xf32>
      tpu.vector_store %arg5[%c0_23, %c0_24], %45 {strides = array<i32>} : memref<8x128xf32, #tpu.memory_space<vmem>>, vector<8x128xf32>,
    } else {
    }
    return
  }
  func.func @transform_0(%arg0: i32, %arg1: i32) -> (i32, i32) {
    %c1_i32 = arith.constant 1 : i32
    %0 = arith.muli %arg0, %c1_i32 : i32
    %1 = arith.addi %0, %arg1 : i32
    %c0_i32 = arith.constant 0 : i32
    %2 = arith.minsi %1, %c0_i32 : i32
    %c0_i32_0 = arith.constant 0 : i32
    %c0_i32_1 = arith.constant 0 : i32
    return %2, %c0_i32_0 : i32, i32
  }
  func.func @transform_1(%arg0: i32, %arg1: i32) -> (i32, i32) {
    %c1_i32 = arith.constant 1 : i32
    %0 = arith.muli %arg0, %c1_i32 : i32
    %1 = arith.addi %0, %arg1 : i32
    %c0_i32 = arith.constant 0 : i32
    %2 = arith.minsi %1, %c0_i32 : i32
    %c0_i32_0 = arith.constant 0 : i32
    %c0_i32_1 = arith.constant 0 : i32
    return %2, %c0_i32_0 : i32, i32
  }
  func.func @transform_2(%arg0: i32, %arg1: i32) -> (i32, i32) {
    %c0_i32 = arith.constant 0 : i32
    %c0_i32_0 = arith.constant 0 : i32
    return %arg0, %c0_i32 : i32, i32
  }
  func.func @transform_3(%arg0: i32, %arg1: i32) -> (i32, i32) {
    %c0_i32 = arith.constant 0 : i32
    %c0_i32_0 = arith.constant 0 : i32
    return %arg0, %c0_i32 : i32, i32
  }
}

</mosaic_0001>

<llo_original>
// kernel: focal_loss_01.1
$region0: #{focal_loss_01.1}
  #allocation0 [shape = 'u32[]', space=smem, size = 0x4, offset = 0x4, fixed_abs, tag = 'smem constant byte address 0x4 - core index']
  #allocation1 [shape = 'u32[144,128]{1,0:T(1,128)}', space=vmem, size = 0x12000, scoped, tag = 'internal scratch']
  %s0 = inlined_call_operand.vmem [shape: f32[16,128], index: 0, kind: input, shape index: {}]
  %s1 = inlined_call_operand.vmem [shape: u8[16,128], index: 1, kind: input, shape index: {}]
  %s2 = inlined_call_operand.vmem [shape: f32[8,128], index: 2, kind: output, shape index: {0}]
  %s3 = inlined_call_operand.vmem [shape: f32[8,128], index: 3, kind: output, shape index: {1}]
  %4 = xla_tuple %s2, %s3
  %s5 = sld [smem:[#allocation0]]
  $region38: #{focal_loss_01.1} parent=0
    _
  %s7 = ssub.s32 1, %s5
  %s8 = scalar_select 0, %s7, %s5
  // Predicated region
  $region2: #{focal_loss_01.1} parent=0 // pred_check
    _
  $region3: #{focal_loss_01.1} parent=0 // pred_check_branch
    %10 = sbr.rel (0) target = $region5
  $region4: #{focal_loss_01.1} parent=0 // pred_region
    %s11 = sadd.s32 0, 0
    %p12 = scmp.lt.s32.totalorder %s11, 0
    %s13 = scalar_select %p12, %s11, 0
    %s14 = smul.u32 2, %s13
    %p15 = scmp.lt.s32.totalorder %s14, 1
    %s16 = scalar_select %p15, %s14, 1
    %s17 = smul.addr %s16, 8
    %s18 = scalar_lea.vmem %s0, %s17
    %s19 = sadd.s32 0, 0
    %p20 = scmp.lt.s32.totalorder %s19, 0
    %s21 = scalar_select %p20, %s19, 0
    %s22 = smul.u32 2, %s21
  $region5: #{focal_loss_01.1} parent=0 // pred_fallthru
    _
  // Predicated region
  $region6: #{focal_loss_01.1} parent=0 // pred_check
    _
  $region7: #{focal_loss_01.1} parent=0 // pred_check_branch
    %24 = sbr.rel (0) target = $region9
  $region8: #{focal_loss_01.1} parent=0 // pred_region
    %s25 = sadd.s32 0, 0
    %p26 = scmp.lt.s32.totalorder %s25, 0
    %s27 = scalar_select %p26, %s25, 0
    %s28 = smul.u32 2, %s27
    %p29 = scmp.lt.s32.totalorder %s28, 1
    %s30 = scalar_select %p29, %s28, 1
    %s31 = smul.addr %s30, 2
    %s32 = scalar_lea.vmem %s1, %s31
    %s33 = sadd.s32 0, 0
    %p34 = scmp.lt.s32.totalorder %s33, 0
    %s35 = scalar_select %p34, %s33, 0
    %s36 = smul.u32 2, %s35
  $region9: #{focal_loss_01.1} parent=0 // pred_fallthru
    _
  %s37 = sadd.s32 0, 0
  %p38 = scmp.lt.s32.totalorder %s37, 0
  %s39 = scalar_select %p38, %s37, 0
  %s40 = smul.u32 2, %s39
  %p41 = scmp.lt.s32.totalorder %s40, 1
  %s42 = scalar_select %p41, %s40, 1
  %s43 = smul.addr %s42, 8
  %s44 = scalar_lea.vmem %s0, %s43
  %s45 = sadd.s32 0, 0
  %p46 = scmp.lt.s32.totalorder %s45, 0
  %s47 = scalar_select %p46, %s45, 0
  %s48 = smul.u32 2, %s47
  %p49 = scmp.lt.s32.totalorder %s48, 1
  %s50 = scalar_select %p49, %s48, 1
  %s51 = smul.addr %s50, 2
  %s52 = scalar_lea.vmem %s1, %s51
  %s53 = sadd.s32 0, 0
  %p54 = scmp.lt.s32.totalorder %s53, 0
  %s55 = scalar_select %p54, %s53, 0
  %s56 = smul.u32 2, %s55
  %p57 = scmp.lt.s32.totalorder %s56, 1
  %s58 = scalar_select %p57, %s56, 1
  %s59 = smul.addr %s58, 8
  %s60 = scalar_lea.vmem %s0, %s59
  %s61 = sadd.s32 0, 0
  %p62 = scmp.lt.s32.totalorder %s61, 0
  %s63 = scalar_select %p62, %s61, 0
  %s64 = smul.u32 2, %s63
  %s65 = sadd.s32 0, 0
  %p66 = scmp.lt.s32.totalorder %s65, 0
  %s67 = scalar_select %p66, %s65, 0
  %s68 = smul.u32 2, %s67
  %p69 = scmp.lt.s32.totalorder %s68, 1
  %s70 = scalar_select %p69, %s68, 1
  %s71 = smul.addr %s70, 2
  %s72 = scalar_lea.vmem %s1, %s71
  %s73 = sadd.s32 0, 0
  %p74 = scmp.lt.s32.totalorder %s73, 0
  %s75 = scalar_select %p74, %s73, 0
  %s76 = smul.u32 2, %s75
  %p77 = scmp.eq.s32.totalorder 0, 0
  // Predicated region
  $region10: #{focal_loss_01.1} parent=0 // pred_check
    %p78 = pneg %p77
  $region11: #{focal_loss_01.1} parent=0 // pred_check_branch
    %80 = sbr.rel (%p78) target = $region13
  $region12: #{focal_loss_01.1} parent=0 // pred_region
    %81 = vst [vmem:[%s2] sm:$0xff] 0.0
    %82 = vst [vmem:[%s3] sm:$0xff] 0.0
  $region13: #{focal_loss_01.1} parent=0 // pred_fallthru
    _
  %v83 = vld [vmem:[%s60] sm:$0xff]
  %v84 = vld [vmem:[%s60 + $0x8] sm:$0xff]
  %v85 = vld [vmem:[%s72] sm:$0x3]
  %v86 = vld [vmem:[%s72 + $0x2] sm:$0x3]
  %v87 = vunpack.c.0.s8 %v85
  %v88 = vunpack.c.0.s8 %v86
  %v89 = vand.u32 %v87, 255
  %v90 = vand.u32 %v88, 255
  %vm91 = vcmp.ne.s32.totalorder %v89, 255
  %vm92 = vcmp.ne.s32.totalorder %v90, 255
  %vm93 = vcmp.eq.s32.totalorder %v89, 1
  %vm94 = vcmp.eq.s32.totalorder %v90, 1
  %v95 = vsub.f32 1.0, %v83
  %v96 = vsub.f32 1.0, %v84
  %v97 = vsel %vm93, %v83, %v95
  %v98 = vsel %vm94, %v84, %v96
  %v99 = vlog2.pop %v97
  %v100 = vmul.f32 %v99, 0.6931472
  %v101 = vlog2.pop %v98
  %v102 = vmul.f32 %v101, 0.6931472
  %v103 = vmax.f32 %v100, -100.0
  %v104 = vmax.f32 %v102, -100.0
  %v105 = vsub.f32 0.0, %v103
  %v106 = vsub.f32 0.0, %v104
  %s107 = sadd.s32 0, 0
  %p108 = scmp.lt.s32.totalorder %s107, 1
  // Predicated region
  $region14: #{focal_loss_01.1} parent=0 // pred_check
    %p109 = pneg %p108
  $region15: #{focal_loss_01.1} parent=0 // pred_check_branch
    %111 = sbr.rel (%p109) target = $region17
  $region16: #{focal_loss_01.1} parent=0 // pred_region
    %v112 = vsel %vm91, %v105, 0.0
    %v113 = vsel %vm92, %v106, 0.0
    %v114 = vsel %vm91, 1.0, 0.0
    %v115 = vsel %vm92, 1.0, 0.0
    %v116 = vld [vmem:[%s2] sm:$0xff]
    %v117 = vadd.f32 %v112, %v113
    %v118 = vadd.f32 %v116, %v117
    %119 = vst [vmem:[%s2] sm:$0xff] %v118
    %v120 = vld [vmem:[%s3] sm:$0xff]
    %v121 = vadd.f32 %v114, %v115
    %v122 = vadd.f32 %v120, %v121
    %123 = vst [vmem:[%s3] sm:$0xff] %v122
  $region17: #{focal_loss_01.1} parent=0 // pred_fallthru
    _
  %p124 = scmp.ge.s32.totalorder %s107, 1
  // Predicated region
  $region18: #{focal_loss_01.1} parent=0 // pred_check
    %p125 = pneg %p124
  $region19: #{focal_loss_01.1} parent=0 // pred_check_branch
    %127 = sbr.rel (%p125) target = $region21
  $region20: #{focal_loss_01.1} parent=0 // pred_region
    %s128 = smul.u32 %s107, 16
    %s129 = ssub.s32 16, %s128
    %v130 = vlaneseq
    %v131 = vshrl.u32 %v130, 7
    %v132 = vadd.s32 %v131, 8
    %v133 = vstv %s129
    %vm134 = vcmp.lt.s32.totalorder %v131, %v133
    %vm135 = vcmp.lt.s32.totalorder %v132, %v133
    %vm136 = vmand %vm91, %vm134
    %vm137 = vmand %vm92, %vm135
    %v138 = vsel %vm136, %v105, 0.0
    %v139 = vsel %vm137, %v106, 0.0
    %v140 = vsel %vm136, 1.0, 0.0
    %v141 = vsel %vm137, 1.0, 0.0
    %v142 = vld [vmem:[%s2] sm:$0xff]
    %v143 = vadd.f32 %v138, %v139
    %v144 = vadd.f32 %v142, %v143
    %145 = vst [vmem:[%s2] sm:$0xff] %v144
    %v146 = vld [vmem:[%s3] sm:$0xff]
    %v147 = vadd.f32 %v140, %v141
    %v148 = vadd.f32 %v146, %v147
    %149 = vst [vmem:[%s3] sm:$0xff] %v148
  $region21: #{focal_loss_01.1} parent=0 // pred_fallthru
    _
  // Predicated region
  $region22: #{focal_loss_01.1} parent=0 // pred_check
    _
  $region23: #{focal_loss_01.1} parent=0 // pred_check_branch
    %151 = sbr.rel (0) target = $region25
  $region24: #{focal_loss_01.1} parent=0 // pred_region
    _
  $region25: #{focal_loss_01.1} parent=0 // pred_fallthru
    _
  // Predicated region
  $region26: #{focal_loss_01.1} parent=0 // pred_check
    _
  $region27: #{focal_loss_01.1} parent=0 // pred_check_branch
    %153 = sbr.rel (0) target = $region29
  $region28: #{focal_loss_01.1} parent=0 // pred_region
    _
  $region29: #{focal_loss_01.1} parent=0 // pred_fallthru
    _
  // Predicated region
  $region30: #{focal_loss_01.1} parent=0 // pred_check
    _
  $region31: #{focal_loss_01.1} parent=0 // pred_check_branch
    %155 = sbr.rel (0) target = $region33
  $region32: #{focal_loss_01.1} parent=0 // pred_region
    _
  $region33: #{focal_loss_01.1} parent=0 // pred_fallthru
    _
  // Predicated region
  $region34: #{focal_loss_01.1} parent=0 // pred_check
    _
  $region35: #{focal_loss_01.1} parent=0 // pred_check_branch
    %157 = sbr.rel (0) target = $region37
  $region36: #{focal_loss_01.1} parent=0 // pred_region
    _
  $region37: #{focal_loss_01.1} parent=0 // pred_fallthru
    _

</llo_original>
